<compile_context>
chip_gen: v7x
topology: tpu7x:2x2x1
jax: 0.10.0
libtpu: 0.0.40
codegen_flags: <defaults>
</compile_context>

<pallas_src>
import functools

import jax
import jax.numpy as jnp
from jax.experimental import pallas as pl
from jax.experimental.pallas import tpu as pltpu


def mlp_kernel(x_ref, wp_ref, bp_ref, y_ref, o_ref, *,
               B, L, D, H, O, O_pad, n_scale):
    """Fused MLP forward, single invocation.

    x_ref : (B*L, D)        flattened activations (per-batch rows are sublane-
                            aligned when L % 8 == 0; other L is correct but slower)
    wp_ref: (D+2H, O_pad)   packed weights: rows [0:D]=fc1, [D:D+H]=fc2,
                            [D+H:D+2H]=fc3, zero-padded to O_pad lanes
    bp_ref: (3, O_pad)      packed biases (fc1, fc2, fc3), zero-padded
    y_ref : (B, L, O_pad)   lane-dense padded output (real data in [..., :O])
    o_ref : (B, O_pad)      lane-dense padded weighted mean over seq
    """
    x2 = x_ref[...]                                              # (B*L, D)

    # Unpack with static, sublane-aligned ref slices.
    w1 = wp_ref[0:D, 0:H]                                        # (D, H)
    w2 = wp_ref[D:D + H, 0:H]                                    # (H, H)
    w3 = wp_ref[D + H:D + 2 * H, :]                              # (H, O_pad)
    b1 = bp_ref[0:1, 0:H]                                        # (1, H)
    b2 = bp_ref[1:2, 0:H]                                        # (1, H)
    b3 = bp_ref[2:3, :]                                          # (1, O_pad)

    # fc1 -> relu -> fc2 -> relu -> fc3 over all B*L rows at once (MXU).
    h1 = jnp.maximum(jnp.dot(x2, w1, preferred_element_type=jnp.float32) + b1, 0.0)
    h2 = jnp.maximum(jnp.dot(h1, w2, preferred_element_type=jnp.float32) + b2, 0.0)
    y = jnp.dot(h2, w3, preferred_element_type=jnp.float32) + b3  # (B*L, O_pad); cols O: == 0

    # Vectorized per-batch epilogue: one min-reduce, one mean-reduce, two stores.
    y3 = y.reshape(B, L, O_pad)                                  # minor dim stays O_pad -> free
    y3 = y3 - jnp.min(y3, axis=1, keepdims=True)                 # pad cols stay exactly 0
    y_ref[...] = y3                                              # single lane-dense store

    # o = mean over seq of (y * x[:, :, :n_scale]), computed lane-dense in O_pad space.
    if n_scale == 1:
        # torch broadcasts the single scale column over every output column.
        scale = jnp.broadcast_to(x2[:, 0:1], (B * L, O_pad))
    else:
        # elementwise scale on the first n_scale (== O) columns; remaining lanes
        # multiply exact zeros in y3, so their value is irrelevant.
        lane = jax.lax.broadcasted_iota(jnp.int32, (B * L, O_pad), 1)
        scale = jnp.zeros((B * L, O_pad), jnp.float32)
        for j in range(n_scale):
            scale = jnp.where(lane == j, x2[:, j:j + 1], scale)
    o_ref[...] = jnp.mean(y3 * scale.reshape(B, L, O_pad), axis=1)  # single lane-dense store


@functools.partial(jax.jit, static_argnames=("fmt",))
def mlp_forward(x, params, fmt):
    """x: (B, L, D) float32.  Returns (o, y) matching the torch module."""
    B, L, D = x.shape
    w1, b1, w2, b2, w3, b3 = params
    H = w1.shape[1]
    O = w3.shape[1]
    n_scale = 2 if fmt == "regBoth" else 1
    if n_scale > 1:
        assert O == n_scale, "regBoth requires outdim == 2 (as in the torch module)"
    assert H <= 128 and O <= 128, "packed-lane layout assumes hidden/out <= 128"

    # Lane-dense padded output width (multiple of 128).
    O_pad = max(128, ((O + 127) // 128) * 128)

    # Pack ALL weights into one HBM operand and all biases into another.
    # Padded columns are exactly zero and remain zero through the kernel.
    # (In production this packing would be done once at init, not per call.)
    wpack = jnp.zeros((D + 2 * H, O_pad), jnp.float32)
    wpack = wpack.at[0:D, 0:H].set(w1)
    wpack = wpack.at[D:D + H, 0:H].set(w2)
    wpack = wpack.at[D + H:D + 2 * H, 0:O].set(w3)
    bpack = jnp.zeros((3, O_pad), jnp.float32)
    bpack = bpack.at[0, 0:H].set(b1.reshape(-1))
    bpack = bpack.at[1, 0:H].set(b2.reshape(-1))
    bpack = bpack.at[2, 0:O].set(b3.reshape(-1))

    # Single contiguous x slab: one DMA, one gridless kernel invocation.
    # NOTE: per-batch rows stay (8,128)-tile aligned because L % 8 == 0 here;
    # other L values are still correct, just less efficient.
    x2 = x.reshape(B * L, D)

    kernel = functools.partial(mlp_kernel, B=B, L=L, D=D, H=H, O=O,
                               O_pad=O_pad, n_scale=n_scale)

    flops = 2 * B * L * (D * H + H * H + H * O_pad)
    bytes_accessed = 4 * (x2.size + wpack.size + bpack.size
                          + B * L * O_pad + B * O_pad)

    y_pad, o_pad = pl.pallas_call(
        kernel,
        out_shape=(
            jax.ShapeDtypeStruct((B, L, O_pad), jnp.float32),
            jax.ShapeDtypeStruct((B, O_pad), jnp.float32),
        ),
        in_specs=[
            pl.BlockSpec(memory_space=pltpu.MemorySpace.VMEM),
            pl.BlockSpec(memory_space=pltpu.MemorySpace.VMEM),
            pl.BlockSpec(memory_space=pltpu.MemorySpace.VMEM),
        ],
        out_specs=(
            pl.BlockSpec(memory_space=pltpu.MemorySpace.VMEM),
            pl.BlockSpec(memory_space=pltpu.MemorySpace.VMEM),
        ),
        cost_estimate=pl.CostEstimate(flops=flops, transcendentals=0,
                                      bytes_accessed=bytes_accessed),
    )(x2, wpack, bpack)

    # Pad lanes are exactly zero; these slices live inside the same jit program
    # (no extra dispatch) and could be dropped entirely by a padded consumer.
    return o_pad[:, :O], y_pad[:, :, :O]


def init_params(key, input_size, hidden_size, outdim):
    """Deterministic init, mirroring nn.Linear default U(-1/sqrt(fan_in), 1/sqrt(fan_in))."""
    ks = jax.random.split(key, 6)

    def lin(kw, kb, fan_in, fan_out):
        bound = 1.0 / jnp.sqrt(fan_in)
        w = jax.random.uniform(kw, (fan_in, fan_out), jnp.float32, -bound, bound)
        b = jax.random.uniform(kb, (1, fan_out), jnp.float32, -bound, bound)
        return w, b

    w1, b1 = lin(ks[0], ks[1], input_size, hidden_size)
    w2, b2 = lin(ks[2], ks[3], hidden_size, hidden_size)
    w3, b3 = lin(ks[4], ks[5], hidden_size, outdim)
    return (w1, b1, w2, b2, w3, b3)


def mlp_reference(x, params, fmt):
    """Pure-JAX reference of the torch forward pass (for correctness check)."""
    w1, b1, w2, b2, w3, b3 = params
    h = jax.nn.relu(x @ w1 + b1)
    h = jax.nn.relu(h @ w2 + b2)
    y = h @ w3 + b3
    y = y - jnp.min(y, axis=1, keepdims=True)
    n_scale = 2 if fmt == "regBoth" else 1
    o = jnp.mean(y * x[:, :, :n_scale], axis=1)
    return o, y


if __name__ == "__main__":
    # Small shapes consistent with forward(): x is (batch, seq_len, input_size)
    B, L, D = 2, 8, 32          # batch=2, seq=8, input_size=32
    H, O = 32, 2                # hidden=32, outdim=2
    fmt = "regBoth"             # 'regBoth' -> scale by first 2 input features

    key = jax.random.PRNGKey(0)
    kx, kp = jax.random.split(key)
    x = jax.random.normal(kx, (B, L, D), dtype=jnp.float32)
    params = init_params(kp, D, H, O)

    o, y = mlp_forward(x, params, fmt)
    o, y = jax.block_until_ready((o, y))

    o_ref, y_ref = mlp_reference(x, params, fmt)
    assert jnp.allclose(o, o_ref, atol=1e-5, rtol=1e-5), "o mismatch"
    assert jnp.allclose(y, y_ref, atol=1e-5, rtol=1e-5), "x (per-seq) mismatch"

    # Also check the other format path (n_scale = 1 broadcast).
    o1, y1 = jax.block_until_ready(mlp_forward(x, params, "regSingle"))
    o1_ref, y1_ref = mlp_reference(x, params, "regSingle")
    assert jnp.allclose(o1, o1_ref, atol=1e-5, rtol=1e-5), "o mismatch (n_scale=1)"
    assert jnp.allclose(y1, y1_ref, atol=1e-5, rtol=1e-5), "x mismatch (n_scale=1)"

    print("KERNEL_OK")
</pallas_src>

<mosaic_0001>
module attributes {stable_mosaic.version = 11 : i64} {
  func.func @mlp_kernel(%arg0: memref<16x32xf32, #tpu.memory_space<vmem>>, %arg1: memref<96x128xf32, #tpu.memory_space<vmem>>, %arg2: memref<3x128xf32, #tpu.memory_space<vmem>>, %arg3: memref<2x8x128xf32, #tpu.memory_space<vmem>>, %arg4: memref<2x128xf32, #tpu.memory_space<vmem>>) attributes {dimension_semantics = [], scalar_prefetch = 0 : i64, scratch_operands = 0 : i64, tpu.core_type = #tpu.core_type<tc>} {
    %c0 = arith.constant 0 : index
    %c0_0 = arith.constant 0 : index
    %0 = vector.load %arg0[%c0, %c0_0] : memref<16x32xf32, #tpu.memory_space<vmem>>, vector<16x32xf32>
    %c0_1 = arith.constant 0 : index
    %c0_2 = arith.constant 0 : index
    %1 = vector.load %arg1[%c0_1, %c0_2] : memref<96x128xf32, #tpu.memory_space<vmem>>, vector<32x32xf32>
    %c32 = arith.constant 32 : index
    %c0_3 = arith.constant 0 : index
    %2 = vector.load %arg1[%c32, %c0_3] : memref<96x128xf32, #tpu.memory_space<vmem>>, vector<32x32xf32>
    %c64 = arith.constant 64 : index
    %c0_4 = arith.constant 0 : index
    %3 = vector.load %arg1[%c64, %c0_4] : memref<96x128xf32, #tpu.memory_space<vmem>>, vector<32x128xf32>
    %c0_5 = arith.constant 0 : index
    %c0_6 = arith.constant 0 : index
    %4 = vector.load %arg2[%c0_5, %c0_6] : memref<3x128xf32, #tpu.memory_space<vmem>>, vector<1x32xf32>
    %c1 = arith.constant 1 : index
    %c0_7 = arith.constant 0 : index
    %5 = vector.load %arg2[%c1, %c0_7] : memref<3x128xf32, #tpu.memory_space<vmem>>, vector<1x32xf32>
    %c2 = arith.constant 2 : index
    %c0_8 = arith.constant 0 : index
    %6 = vector.load %arg2[%c2, %c0_8] : memref<3x128xf32, #tpu.memory_space<vmem>>, vector<1x128xf32>
    %cst = arith.constant dense<0.000000e+00> : vector<16x32xf32>
    %7 = tpu.matmul %0, %1, %cst {dimension_numbers = #tpu.dot_dimension_numbers<[1], [0], [0], [1], [0, 0, 1, 1], [], []>} : vector<16x32xf32>, vector<32x32xf32>, vector<16x32xf32> -> vector<16x32xf32>
    %8 = vector.broadcast %4 : vector<1x32xf32> to vector<16x32xf32>
    %9 = arith.addf %7, %8 : vector<16x32xf32>
    %cst_9 = arith.constant 0.000000e+00 : f32
    %10 = vector.broadcast %cst_9 : f32 to vector<16x32xf32>
    %11 = arith.maximumf %9, %10 : vector<16x32xf32>
    %cst_10 = arith.constant dense<0.000000e+00> : vector<16x32xf32>
    %12 = tpu.matmul %11, %2, %cst_10 {dimension_numbers = #tpu.dot_dimension_numbers<[1], [0], [0], [1], [0, 0, 1, 1], [], []>} : vector<16x32xf32>, vector<32x32xf32>, vector<16x32xf32> -> vector<16x32xf32>
    %13 = vector.broadcast %5 : vector<1x32xf32> to vector<16x32xf32>
    %14 = arith.addf %12, %13 : vector<16x32xf32>
    %cst_11 = arith.constant 0.000000e+00 : f32
    %15 = vector.broadcast %cst_11 : f32 to vector<16x32xf32>
    %16 = arith.maximumf %14, %15 : vector<16x32xf32>
    %cst_12 = arith.constant dense<0.000000e+00> : vector<16x128xf32>
    %17 = tpu.matmul %16, %3, %cst_12 {dimension_numbers = #tpu.dot_dimension_numbers<[1], [0], [0], [1], [0, 0, 1, 1], [], []>} : vector<16x32xf32>, vector<32x128xf32>, vector<16x128xf32> -> vector<16x128xf32>
    %18 = vector.broadcast %6 : vector<1x128xf32> to vector<16x128xf32>
    %19 = arith.addf %17, %18 : vector<16x128xf32>
    %20 = vector.shape_cast %19 : vector<16x128xf32> to vector<2x8x128xf32>
    %cst_13 = arith.constant dense<0x7F800000> : vector<2x128xf32>
    %21 = vector.multi_reduction <minimumf>, %20, %cst_13 [1] : vector<2x8x128xf32> to vector<2x128xf32>
    %22 = vector.shape_cast %21 : vector<2x128xf32> to vector<2x1x128xf32>
    %23 = vector.broadcast %22 : vector<2x1x128xf32> to vector<2x8x128xf32>
    %24 = arith.subf %20, %23 : vector<2x8x128xf32>
    %c0_14 = arith.constant 0 : index
    %c0_15 = arith.constant 0 : index
    %c0_16 = arith.constant 0 : index
    %25 = vector.load %arg3[%c0_14, %c0_15, %c0_16] : memref<2x8x128xf32, #tpu.memory_space<vmem>>, vector<2x8x128xf32>
    tpu.vector_store %arg3[%c0_14, %c0_15, %c0_16], %24 {strides = array<i32>} : memref<2x8x128xf32, #tpu.memory_space<vmem>>, vector<2x8x128xf32>,
    %26 = tpu.iota {dimensions = array<i32: 1>} : vector<16x128xi32>
    %cst_17 = arith.constant 0.000000e+00 : f32
    %27 = vector.broadcast %cst_17 : f32 to vector<16x128xf32>
    %c0_i32 = arith.constant 0 : i32
    %28 = vector.broadcast %c0_i32 : i32 to vector<16x128xi32>
    %29 = arith.cmpi eq, %26, %28 : vector<16x128xi32>
    %30 = vector.extract_strided_slice %0 {offsets = [0, 0], sizes = [16, 1], strides = [1, 1]} : vector<16x32xf32> to vector<16x1xf32>
    %31 = vector.shape_cast %30 : vector<16x1xf32> to vector<16x1xf32>
    %32 = vector.broadcast %31 : vector<16x1xf32> to vector<16x128xf32>
    %33 = arith.select %29, %32, %27 : vector<16x128xi1>, vector<16x128xf32>
    %c1_i32 = arith.constant 1 : i32
    %34 = vector.broadcast %c1_i32 : i32 to vector<16x128xi32>
    %35 = arith.cmpi eq, %26, %34 : vector<16x128xi32>
    %36 = vector.extract_strided_slice %0 {offsets = [0, 1], sizes = [16, 1], strides = [1, 1]} : vector<16x32xf32> to vector<16x1xf32>
    %37 = vector.shape_cast %36 : vector<16x1xf32> to vector<16x1xf32>
    %38 = vector.broadcast %37 : vector<16x1xf32> to vector<16x128xf32>
    %39 = arith.select %35, %38, %33 : vector<16x128xi1>, vector<16x128xf32>
    %40 = vector.shape_cast %39 : vector<16x128xf32> to vector<2x8x128xf32>
    %41 = arith.mulf %24, %40 : vector<2x8x128xf32>
    %cst_18 = arith.constant dense<0.000000e+00> : vector<2x128xf32>
    %42 = vector.multi_reduction <add>, %41, %cst_18 [1] : vector<2x8x128xf32> to vector<2x128xf32>
    %cst_19 = arith.constant 8.000000e+00 : f32
    %43 = vector.broadcast %cst_19 : f32 to vector<2x128xf32>
    %44 = arith.divf %42, %43 : vector<2x128xf32>
    %c0_20 = arith.constant 0 : index
    %c0_21 = arith.constant 0 : index
    %45 = vector.load %arg4[%c0_20, %c0_21] : memref<2x128xf32, #tpu.memory_space<vmem>>, vector<2x128xf32>
    tpu.vector_store %arg4[%c0_20, %c0_21], %44 {strides = array<i32>} : memref<2x128xf32, #tpu.memory_space<vmem>>, vector<2x128xf32>,
    return
  }
}

</mosaic_0001>

<llo_original>
// kernel: mlp_forward.1
$region0: #{mlp_forward.1}
  #allocation0 [shape = 'u32[]', space=smem, size = 0x4, offset = 0x4, fixed_abs, tag = 'smem constant byte address 0x4 - core index']
  #allocation1 [shape = 'u32[144,128]{1,0:T(1,128)}', space=vmem, size = 0x12000, scoped, tag = 'internal scratch']
  %s0 = inlined_call_operand.vmem [shape: f32[16,32], index: 0, kind: input, shape index: {}]
  %s1 = inlined_call_operand.vmem [shape: f32[96,128], index: 1, kind: input, shape index: {}]
  %s2 = inlined_call_operand.vmem [shape: f32[3,128], index: 2, kind: input, shape index: {}]
  %s3 = inlined_call_operand.vmem [shape: f32[2,8,128], index: 3, kind: output, shape index: {0}]
  %s4 = inlined_call_operand.hbm [shape: f32[2,128], index: 4, kind: output, shape index: {1}]
  %5 = xla_tuple %s3, %s4
  %s6 = sld [smem:[#allocation0]]
  $region30: #{mlp_forward.1} parent=0
    _
  %s8 = ssub.s32 1, %s6
  %s9 = scalar_select 0, %s8, %s6
  $region1: #{mlp_forward.1} parent=0
    #allocation2 [shape = 'u8[1024]{0}', space=vmem, size = 0x400, scoped, tag = 'output window, operand 1, single buffered']
    #allocation3 [shape = 's32[1]{0}', space=sflag, size = 0x4, scoped, tag = 'scoped memory for mlp_forward.1']
    %10 = vsyncpa [#allocation3], 0
    // Predicated region
    $region2: #{mlp_forward.1} parent=1 // pred_check
      _
    $region3: #{mlp_forward.1} parent=1 // pred_check_branch
      %12 = sbr.rel (0) target = $region5
    $region4: #{mlp_forward.1} parent=1 // pred_region
      _
    $region5: #{mlp_forward.1} parent=1 // pred_fallthru
      _
    // Predicated region
    $region6: #{mlp_forward.1} parent=1 // pred_check
      _
    $region7: #{mlp_forward.1} parent=1 // pred_check_branch
      %14 = sbr.rel (0) target = $region9
    $region8: #{mlp_forward.1} parent=1 // pred_region
      _
    $region9: #{mlp_forward.1} parent=1 // pred_fallthru
      _
    // Predicated region
    $region10: #{mlp_forward.1} parent=1 // pred_check
      _
    $region11: #{mlp_forward.1} parent=1 // pred_check_branch
      %16 = sbr.rel (0) target = $region13
    $region12: #{mlp_forward.1} parent=1 // pred_region
      _
    $region13: #{mlp_forward.1} parent=1 // pred_fallthru
      _
    %v17 = vld [vmem:[%s0] sm:$0xff]
    %v18 = vld [vmem:[%s0 + $0x8] sm:$0xff]
    %v19 = vld [vmem:[%s1] sm:$0xff]
    %v20 = vld [vmem:[%s1 + $0x8] sm:$0xff]
    %v21 = vld [vmem:[%s1 + $0x10] sm:$0xff]
    %v22 = vld [vmem:[%s1 + $0x18] sm:$0xff]
    %v23 = vld [vmem:[%s1 + $0x20] sm:$0xff]
    %v24 = vld [vmem:[%s1 + $0x28] sm:$0xff]
    %v25 = vld [vmem:[%s1 + $0x30] sm:$0xff]
    %v26 = vld [vmem:[%s1 + $0x38] sm:$0xff]
    %v27 = vld [vmem:[%s1 + $0x40] sm:$0xff]
    %v28 = vld [vmem:[%s1 + $0x48] sm:$0xff]
    %v29 = vld [vmem:[%s1 + $0x50] sm:$0xff]
    %v30 = vld [vmem:[%s1 + $0x58] sm:$0xff]
    %v31 = vld [vmem:[%s2] sm:$0x1]
    %v32 = vld [vmem:[%s2 + $0x1] sm:$0x1]
    %v33 = vld [vmem:[%s2 + $0x2] sm:$0x1]
    %v34 = vlaneseq
    %v35 = vshrl.u32 %v34, 7
    %v36 = vsub.s32 0, %v35
    %v37 = vrot.slane %v31, %v36
    %vm38 = vcmask 261120
    %v40 = vsel %vm38, %v17, 0
    %v43 = vsel %vm38, %v18, 0
    %45 = vmatprep.subr.mxu0 0.0
    %46 = vmatpush1.msra.mxu0 %v19
    %47 = vmatprep.subr.mxu0 0.0
    %48 = vmatpush1.msra.mxu0 %v20
    %49 = vmatprep.subr.mxu0 0.0
    %50 = vmatpush1.msra.mxu0 %v21
    %51 = vmatprep.subr.mxu0 0.0
    %52 = vmatpush1.msra.mxu0 %v22
    %53 = vmatprep.subr.mxu0 0.0
    %54 = vmatpush1.msra.mxu0 0.0
    %55 = vmatprep.subr.mxu0 0.0
    %56 = vmatpush1.msra.mxu0 0.0
    %57 = vmatprep.subr.mxu0 0.0
    %58 = vmatpush1.msra.mxu0 0.0
    %59 = vmatprep.subr.mxu0 0.0
    %60 = vmatpush1.msra.mxu0 0.0
    %61 = vmatprep.subr.mxu0 0.0
    %62 = vmatpush1.msra.mxu0 0.0
    %63 = vmatprep.subr.mxu0 0.0
    %64 = vmatpush1.msra.mxu0 0.0
    %65 = vmatprep.subr.mxu0 0.0
    %66 = vmatpush1.msra.mxu0 0.0
    %67 = vmatprep.subr.mxu0 0.0
    %68 = vmatpush1.msra.mxu0 0.0
    %69 = vmatprep.subr.mxu0 0.0
    %70 = vmatpush1.msra.mxu0 0.0
    %71 = vmatprep.subr.mxu0 0.0
    %72 = vmatpush1.msra.mxu0 0.0
    %73 = vmatprep.subr.mxu0 0.0
    %74 = vmatpush1.msra.mxu0 0.0
    %75 = vmatprep.subr.mxu0 0.0
    %76 = vmatpush1.msra.mxu0 0.0
    %77 = vmatprep.subr.mxu0 0.0
    %78 = vmatpush1.msra.mxu0 0.0
    %79 = vmatprep.subr.mxu0 0.0
    %80 = vmatpush1.msra.mxu0 0.0
    %81 = vmatprep.subr.mxu0 0.0
    %82 = vmatpush1.msra.mxu0 0.0
    %83 = vmatprep.subr.mxu0 0.0
    %84 = vmatpush1.msra.mxu0 0.0
    %85 = vmatprep.subr.mxu0 0.0
    %86 = vmatpush1.msra.mxu0 0.0
    %87 = vmatprep.subr.mxu0 0.0
    %88 = vmatpush1.msra.mxu0 0.0
    %89 = vmatprep.subr.mxu0 0.0
    %90 = vmatpush1.msra.mxu0 0.0
    %91 = vmatprep.subr.mxu0 0.0
    %92 = vmatpush1.msra.mxu0 0.0
    %93 = vmatprep.subr.mxu0 0.0
    %94 = vmatpush1.msra.mxu0 0.0
    %95 = vmatprep.subr.mxu0 0.0
    %96 = vmatpush1.msra.mxu0 0.0
    %97 = vmatprep.subr.mxu0 0.0
    %98 = vmatpush1.msra.mxu0 0.0
    %99 = vmatprep.subr.mxu0 0.0
    %100 = vmatpush1.msra.mxu0 0.0
    %101 = vmatprep.subr.mxu0 0.0
    %102 = vmatpush1.msra.mxu0 0.0
    %103 = vmatprep.subr.mxu0 0.0
    %104 = vmatpush1.msra.mxu0 0.0
    %105 = vmatprep.subr.mxu0 0.0
    %106 = vmatpush1.msra.mxu0 0.0
    %107 = vmatprep.subr.mxu0 0.0
    %108 = vmatpush1.msra.mxu0 0.0
    %109 = vmatprep.mubr.f32.mxu0 0.0
    %110 = vmatmul.mubr.f32.gmra.mrb[0].mxu0 %v40
    %v111 = vpop.f32.mrb[0].mxu0
    %v112 = vadd.f32 %v37, %v111
    %v113 = vpop.f32.mrb[0].mxu0
    %114 = vmatprep.mubr.f32.mxu0 0.0
    %115 = vmatmul.mubr.f32.gmra.mrb[0].mxu0 %v43
    %v116 = vpop.f32.mrb[0].mxu0
    %v117 = vadd.f32 %v37, %v116
    %v118 = vpop.f32.mrb[0].mxu0
    %119 = vdwg.mxu0
    %v120 = vmax.f32 %v112, 0.0
    %v121 = vmax.f32 %v117, 0.0
    %v122 = vlaneseq
    %v123 = vshrl.u32 %v122, 7
    %v124 = vsub.s32 0, %v123
    %v125 = vrot.slane %v32, %v124
    %v127 = vsel %vm38, %v120, 0
    %v130 = vsel %vm38, %v121, 0
    %132 = vmatprep.subr.mxu0 0.0
    %133 = vmatpush1.msra.mxu0 %v23
    %134 = vmatprep.subr.mxu0 0.0
    %135 = vmatpush1.msra.mxu0 %v24
    %136 = vmatprep.subr.mxu0 0.0
    %137 = vmatpush1.msra.mxu0 %v25
    %138 = vmatprep.subr.mxu0 0.0
    %139 = vmatpush1.msra.mxu0 %v26
    %140 = vmatprep.subr.mxu0 0.0
    %141 = vmatpush1.msra.mxu0 0.0
    %142 = vmatprep.subr.mxu0 0.0
    %143 = vmatpush1.msra.mxu0 0.0
    %144 = vmatprep.subr.mxu0 0.0
    %145 = vmatpush1.msra.mxu0 0.0
    %146 = vmatprep.subr.mxu0 0.0
    %147 = vmatpush1.msra.mxu0 0.0
    %148 = vmatprep.subr.mxu0 0.0
    %149 = vmatpush1.msra.mxu0 0.0
    %150 = vmatprep.subr.mxu0 0.0
    %151 = vmatpush1.msra.mxu0 0.0
    %152 = vmatprep.subr.mxu0 0.0
    %153 = vmatpush1.msra.mxu0 0.0
    %154 = vmatprep.subr.mxu0 0.0
    %155 = vmatpush1.msra.mxu0 0.0
    %156 = vmatprep.subr.mxu0 0.0
    %157 = vmatpush1.msra.mxu0 0.0
    %158 = vmatprep.subr.mxu0 0.0
    %159 = vmatpush1.msra.mxu0 0.0
    %160 = vmatprep.subr.mxu0 0.0
    %161 = vmatpush1.msra.mxu0 0.0
    %162 = vmatprep.subr.mxu0 0.0
    %163 = vmatpush1.msra.mxu0 0.0
    %164 = vmatprep.subr.mxu0 0.0
    %165 = vmatpush1.msra.mxu0 0.0
    %166 = vmatprep.subr.mxu0 0.0
    %167 = vmatpush1.msra.mxu0 0.0
    %168 = vmatprep.subr.mxu0 0.0
    %169 = vmatpush1.msra.mxu0 0.0
    %170 = vmatprep.subr.mxu0 0.0
    %171 = vmatpush1.msra.mxu0 0.0
    %172 = vmatprep.subr.mxu0 0.0
    %173 = vmatpush1.msra.mxu0 0.0
    %174 = vmatprep.subr.mxu0 0.0
    %175 = vmatpush1.msra.mxu0 0.0
    %176 = vmatprep.subr.mxu0 0.0
    %177 = vmatpush1.msra.mxu0 0.0
    %178 = vmatprep.subr.mxu0 0.0
    %179 = vmatpush1.msra.mxu0 0.0
    %180 = vmatprep.subr.mxu0 0.0
    %181 = vmatpush1.msra.mxu0 0.0
    %182 = vmatprep.subr.mxu0 0.0
    %183 = vmatpush1.msra.mxu0 0.0
    %184 = vmatprep.subr.mxu0 0.0
    %185 = vmatpush1.msra.mxu0 0.0
    %186 = vmatprep.subr.mxu0 0.0
    %187 = vmatpush1.msra.mxu0 0.0
    %188 = vmatprep.subr.mxu0 0.0
    %189 = vmatpush1.msra.mxu0 0.0
    %190 = vmatprep.subr.mxu0 0.0
    %191 = vmatpush1.msra.mxu0 0.0
    %192 = vmatprep.subr.mxu0 0.0
    %193 = vmatpush1.msra.mxu0 0.0
    %194 = vmatprep.subr.mxu0 0.0
    %195 = vmatpush1.msra.mxu0 0.0
    %196 = vmatprep.mubr.f32.mxu0 0.0
    %197 = vmatmul.mubr.f32.gmra.mrb[0].mxu0 %v127
    %v198 = vpop.f32.mrb[0].mxu0
    %v199 = vadd.f32 %v125, %v198
    %v200 = vpop.f32.mrb[0].mxu0
    %201 = vmatprep.mubr.f32.mxu0 0.0
    %202 = vmatmul.mubr.f32.gmra.mrb[0].mxu0 %v130
    %v203 = vpop.f32.mrb[0].mxu0
    %v204 = vadd.f32 %v125, %v203
    %v205 = vpop.f32.mrb[0].mxu0
    %206 = vdwg.mxu0
    %v207 = vmax.f32 %v199, 0.0
    %v208 = vmax.f32 %v204, 0.0
    %v209 = vlaneseq
    %v210 = vshrl.u32 %v209, 7
    %v211 = vsub.s32 0, %v210
    %v212 = vrot.slane %v33, %v211
    %v214 = vsel %vm38, %v207, 0
    %v217 = vsel %vm38, %v208, 0
    %219 = vmatprep.subr.mxu0 0.0
    %220 = vmatpush1.msra.mxu0 %v27
    %221 = vmatprep.subr.mxu0 0.0
    %222 = vmatpush1.msra.mxu0 %v28
    %223 = vmatprep.subr.mxu0 0.0
    %224 = vmatpush1.msra.mxu0 %v29
    %225 = vmatprep.subr.mxu0 0.0
    %226 = vmatpush1.msra.mxu0 %v30
    %227 = vmatprep.subr.mxu0 0.0
    %228 = vmatpush1.msra.mxu0 0.0
    %229 = vmatprep.subr.mxu0 0.0
    %230 = vmatpush1.msra.mxu0 0.0
    %231 = vmatprep.subr.mxu0 0.0
    %232 = vmatpush1.msra.mxu0 0.0
    %233 = vmatprep.subr.mxu0 0.0
    %234 = vmatpush1.msra.mxu0 0.0
    %235 = vmatprep.subr.mxu0 0.0
    %236 = vmatpush1.msra.mxu0 0.0
    %237 = vmatprep.subr.mxu0 0.0
    %238 = vmatpush1.msra.mxu0 0.0
    %239 = vmatprep.subr.mxu0 0.0
    %240 = vmatpush1.msra.mxu0 0.0
    %241 = vmatprep.subr.mxu0 0.0
    %242 = vmatpush1.msra.mxu0 0.0
    %243 = vmatprep.subr.mxu0 0.0
    %244 = vmatpush1.msra.mxu0 0.0
    %245 = vmatprep.subr.mxu0 0.0
    %246 = vmatpush1.msra.mxu0 0.0
    %247 = vmatprep.subr.mxu0 0.0
    %248 = vmatpush1.msra.mxu0 0.0
    %249 = vmatprep.subr.mxu0 0.0
    %250 = vmatpush1.msra.mxu0 0.0
    %251 = vmatprep.subr.mxu0 0.0
    %252 = vmatpush1.msra.mxu0 0.0
    %253 = vmatprep.subr.mxu0 0.0
    %254 = vmatpush1.msra.mxu0 0.0
    %255 = vmatprep.subr.mxu0 0.0
    %256 = vmatpush1.msra.mxu0 0.0
    %257 = vmatprep.subr.mxu0 0.0
    %258 = vmatpush1.msra.mxu0 0.0
    %259 = vmatprep.subr.mxu0 0.0
    %260 = vmatpush1.msra.mxu0 0.0
    %261 = vmatprep.subr.mxu0 0.0
    %262 = vmatpush1.msra.mxu0 0.0
    %263 = vmatprep.subr.mxu0 0.0
    %264 = vmatpush1.msra.mxu0 0.0
    %265 = vmatprep.subr.mxu0 0.0
    %266 = vmatpush1.msra.mxu0 0.0
    %267 = vmatprep.subr.mxu0 0.0
    %268 = vmatpush1.msra.mxu0 0.0
    %269 = vmatprep.subr.mxu0 0.0
    %270 = vmatpush1.msra.mxu0 0.0
    %271 = vmatprep.subr.mxu0 0.0
    %272 = vmatpush1.msra.mxu0 0.0
    %273 = vmatprep.subr.mxu0 0.0
    %274 = vmatpush1.msra.mxu0 0.0
    %275 = vmatprep.subr.mxu0 0.0
    %276 = vmatpush1.msra.mxu0 0.0
    %277 = vmatprep.subr.mxu0 0.0
    %278 = vmatpush1.msra.mxu0 0.0
    %279 = vmatprep.subr.mxu0 0.0
    %280 = vmatpush1.msra.mxu0 0.0
    %281 = vmatprep.subr.mxu0 0.0
    %282 = vmatpush1.msra.mxu0 0.0
    %283 = vmatprep.mubr.f32.mxu0 0.0
    %284 = vmatmul.mubr.f32.gmra.mrb[0].mxu0 %v214
    %v285 = vpop.f32.mrb[0].mxu0
    %v286 = vadd.f32 %v212, %v285
    %v287 = vpop.f32.mrb[0].mxu0
    %288 = vmatprep.mubr.f32.mxu0 0.0
    %289 = vmatmul.mubr.f32.gmra.mrb[0].mxu0 %v217
    %v290 = vpop.f32.mrb[0].mxu0
    %v291 = vadd.f32 %v212, %v290
    %v292 = vpop.f32.mrb[0].mxu0
    %293 = vdwg.mxu0
    %v294 = vrot.slane %v286, 4
    %v295 = vmin.f32 %v286, %v294
    %v296 = vrot.slane %v295, 2
    %v297 = vmin.f32 %v295, %v296
    %v298 = vrot.slane %v297, 1
    %v299 = vmin.f32 %v297, %v298
    %v300 = vrot.slane %v291, 4
    %v301 = vmin.f32 %v291, %v300
    %v302 = vrot.slane %v301, 2
    %v303 = vmin.f32 %v301, %v302
    %v304 = vrot.slane %v303, 1
    %v305 = vmin.f32 %v303, %v304
    %v306 = vsub.f32 %v286, %v299
    %v307 = vsub.f32 %v291, %v305
    %308 = vst [vmem:[%s3] sm:$0xff] %v306
    %309 = vst [vmem:[%s3 + $0x8] sm:$0xff] %v307
    %v310 = vlaneseq
    %v311 = vand.u32 %v310, 127
    %vm312 = vcmp.eq.s32.totalorder %v311, 0
    %313 = vset.pattern.permute.xlu0 0
    %314 = vperm.xlu0 %313, %v17
    %v315 = vpop.permute.xlu0 %314
    %317 = vset.pattern.permute.xlu0 0
    %318 = vperm.xlu0 %317, %v18
    %v319 = vpop.permute.xlu0 %318
    %v321 = vsel %vm312, %v315, 0.0
    %v322 = vsel %vm312, %v319, 0.0
    %vm323 = vcmp.eq.s32.totalorder %v311, 1
    %324 = vset.pattern.permute.xlu0 1
    %325 = vperm.xlu0 %324, %v17
    %v326 = vpop.permute.xlu0 %325
    %328 = vset.pattern.permute.xlu0 1
    %329 = vperm.xlu0 %328, %v18
    %v330 = vpop.permute.xlu0 %329
    %v332 = vsel %vm323, %v326, %v321
    %v333 = vsel %vm323, %v330, %v322
    %v334 = vmul.f32 %v306, %v332
    %v335 = vmul.f32 %v307, %v333
    %v336 = vrot.slane %v334, 4
    %v337 = vadd.f32 %v334, %v336
    %v338 = vrot.slane %v337, 2
    %v339 = vadd.f32 %v337, %v338
    %v340 = vrot.slane %v339, 1
    %v341 = vadd.f32 %v339, %v340
    %v342 = vrot.slane %v335, 4
    %v343 = vadd.f32 %v335, %v342
    %v344 = vrot.slane %v343, 2
    %v345 = vadd.f32 %v343, %v344
    %v346 = vrot.slane %v345, 1
    %v347 = vadd.f32 %v345, %v346
    %v348 = vrcp.pop 8.0
    %v349 = vmul.f32 %v341, %v348
    %v350 = vmul.f32 %v347, %v348
    %vm353 = vcmask 1041409
    %v354 = vsel %vm353, %v350, %v349
    %356 = vst [vmem:[#allocation2] sm:$0x3] %v354
    // Predicated region
    $region14: #{mlp_forward.1} parent=1 // pred_check
      _
    $region15: #{mlp_forward.1} parent=1 // pred_check_branch
      %358 = sbr.rel (0) target = $region17
    $region16: #{mlp_forward.1} parent=1 // pred_region
      _
    $region17: #{mlp_forward.1} parent=1 // pred_fallthru
      _
    // Predicated region
    $region18: #{mlp_forward.1} parent=1 // pred_check
      _
    $region19: #{mlp_forward.1} parent=1 // pred_check_branch
      %360 = sbr.rel (0) target = $region21
    $region20: #{mlp_forward.1} parent=1 // pred_region
      %s362 = ssub.s32 32, 32
      %363 = vsyncadd [#allocation3], %s362
      %s365 = sshll.u32 [#allocation2], 4
      %s366 = int_to_ptr.vmem [resolvable:$true] %s365
      %368 = dma.vmem_to_hbm [thread:$0]  %s366, 32, %s4, [#allocation3]
    $region21: #{mlp_forward.1} parent=1 // pred_fallthru
      _
    // Predicated region
    $region22: #{mlp_forward.1} parent=1 // pred_check
      _
    $region23: #{mlp_forward.1} parent=1 // pred_check_branch
      %370 = sbr.rel (0) target = $region25
    $region24: #{mlp_forward.1} parent=1 // pred_region
      _
    $region25: #{mlp_forward.1} parent=1 // pred_fallthru
      _
    // Predicated region
    $region26: #{mlp_forward.1} parent=1 // pred_check
      _
    $region27: #{mlp_forward.1} parent=1 // pred_check_branch
      %372 = sbr.rel (0) target = $region29
    $region28: #{mlp_forward.1} parent=1 // pred_region
      %373 = dma.done [#allocation3], 32
    $region29: #{mlp_forward.1} parent=1 // pred_fallthru
      _
    %374 = vsyncpa [#allocation3], 1

</llo_original>
